<compile_context>
chip_gen: v7x
topology: tpu7x:2x2x1
jax: 0.10.0
libtpu: 0.0.40
codegen_flags: <defaults>
</compile_context>

<pallas_src>
import jax
import jax.numpy as jnp
from jax.experimental import pallas as pl
from jax.experimental.pallas import tpu as pltpu

K = 7                 # spatial-attention kernel size
PAD = (K - 1) // 2    # = 3
BN_EPS = 1e-5


# ---------------------------------------------------------------------------
# Generation-aware VMEM budgets
# ---------------------------------------------------------------------------
def _vmem_budgets():
    """Returns (per-block byte budget, vmem_limit_bytes) for this TPU gen."""
    vmem_cap = 64 * 1024 * 1024
    try:
        info = pltpu.get_tpu_info()
        vmem_cap = int(getattr(info, "vmem_capacity_bytes", vmem_cap))
    except Exception:
        pass
    if vmem_cap > 64 * 1024 * 1024:
        # v5e / v6e: 128 MiB VMEM -> big blocks hit the HBM-roofline plateau.
        return 8 * 1024 * 1024, 64 * 1024 * 1024
    # v7x-class: only 64 MiB VMEM -> keep the 4-buffer footprint <= ~24 MiB.
    return 4 * 1024 * 1024, 32 * 1024 * 1024


def _pick_channel_tile(C, HW, itemsize, budget_bytes):
    """Largest channel tile (multiple of 8, or C itself) whose (tile, HW)
    block fits the per-block budget. Never returns an unbounded tile."""
    if C * HW * itemsize <= budget_bytes:
        return C
    t = (budget_bytes // (HW * itemsize)) // 8 * 8
    t = max(8, t)
    return min(t, C)


# ---------------------------------------------------------------------------
# Stage 1: lane-dense channel pooling  max_c(x), mean_c(x)  -> (B, 1, HW)
# ---------------------------------------------------------------------------
def _make_pool_kernel(C, tcc):
    need_mask = (C % tcc) != 0

    def pool_kernel(x_ref, max_ref, mean_ref):
        # x_ref: (1, tcc, HW) block; max_ref / mean_ref: (1, 1, HW) resident
        # accumulators (same output block across the channel grid axis).
        cb = pl.program_id(1)
        xb = x_ref[...].astype(jnp.float32)

        if need_mask:
            ch = cb * tcc + jax.lax.broadcasted_iota(jnp.int32, xb.shape, 1)
            valid = ch < C
            xmax = jnp.max(jnp.where(valid, xb, -jnp.inf), axis=1,
                           keepdims=True)
            xsum = jnp.sum(jnp.where(valid, xb, 0.0), axis=1, keepdims=True)
        else:
            xmax = jnp.max(xb, axis=1, keepdims=True)
            xsum = jnp.sum(xb, axis=1, keepdims=True)

        @pl.when(cb == 0)
        def _init():
            max_ref[...] = xmax
            mean_ref[...] = xsum

        @pl.when(cb > 0)
        def _accumulate():
            max_ref[...] = jnp.maximum(max_ref[...], xmax)
            mean_ref[...] = mean_ref[...] + xsum

        @pl.when(cb == pl.num_programs(1) - 1)
        def _finalize():
            mean_ref[...] = mean_ref[...] * (1.0 / C)

    return pool_kernel


# ---------------------------------------------------------------------------
# Stage 2: tiny mask kernel (pad -> 7x7 conv -> BN -> sigmoid -> threshold)
# ---------------------------------------------------------------------------
def sa_mask_kernel(maxmap_ref, meanmap_ref, w_ref, mask_ref, max_pad, mean_pad):
    # maxmap_ref / meanmap_ref: (B, H, W) f32 (VMEM)
    # w_ref: (2*K*K,) f32 (SMEM), [in_ch, ky, kx] order; in_ch 0 = max, 1 = mean
    # mask_ref: (B, H, W) f32 output
    # max_pad / mean_pad: (B, H+2*PAD, W+2*PAD) VMEM scratch (built once here)
    B, H, W = maxmap_ref.shape

    max_pad[...] = jnp.zeros_like(max_pad)
    mean_pad[...] = jnp.zeros_like(mean_pad)
    max_pad[:, PAD:PAD + H, PAD:PAD + W] = maxmap_ref[...]
    mean_pad[:, PAD:PAD + H, PAD:PAD + W] = meanmap_ref[...]

    padded_max = max_pad[...]                              # (B, H+6, W+6)
    padded_mean = mean_pad[...]

    # 7x7 conv, 2 -> 1 channels, stride 1, "same" padding, no bias.
    # kx (lane-direction) slices hoisted out of the ky loop.
    acc = jnp.zeros((B, H, W), jnp.float32)
    for kx in range(K):
        win_max = padded_max[:, :, kx:kx + W]              # (B, H+6, W)
        win_mean = padded_mean[:, :, kx:kx + W]
        for ky in range(K):
            w_max = w_ref[0 * K * K + ky * K + kx]         # SMEM scalars
            w_mean = w_ref[1 * K * K + ky * K + kx]
            acc = (acc
                   + w_max * win_max[:, ky:ky + H, :]
                   + w_mean * win_mean[:, ky:ky + H, :])

    # BatchNorm2d(1), training mode: batch stats (biased var), gamma=1, beta=0.
    n = B * H * W
    mu = jnp.sum(acc) / n
    diff = acc - mu
    var = jnp.sum(diff * diff) / n
    y = diff * jax.lax.rsqrt(var + BN_EPS)

    # sigmoid -> scale, per-batch spatial max, strict-< suppression mask
    # (clamp(min=0) on a {0,1} float is a no-op).
    scale = jax.nn.sigmoid(y)                              # (B, H, W)
    smax = jnp.max(scale, axis=2, keepdims=True)
    smax = jnp.max(smax, axis=1, keepdims=True)            # (B, 1, 1)
    mask_ref[...] = (scale < smax * 0.95).astype(jnp.float32)


# ---------------------------------------------------------------------------
# Stage 3: lane-dense, pipelined elementwise multiply  out = x * mask
# ---------------------------------------------------------------------------
def sa_apply_kernel(x_ref, m_ref, o_ref):
    # x_ref: (1, TC, HW), m_ref: (1, 1, HW), o_ref: (1, TC, HW)
    o_ref[...] = (x_ref[...] * m_ref[...]).astype(o_ref.dtype)


# ---------------------------------------------------------------------------
# Forward wrapper
# ---------------------------------------------------------------------------
def sa_forward(x, conv_w):
    """x: (B, C, H, W) float32, conv_w: (1, 2, 7, 7) float32 -> (B, C, H, W)."""
    B, C, H, W = x.shape
    HW = H * W
    itemsize = jnp.dtype(x.dtype).itemsize
    block_budget, vmem_limit = _vmem_budgets()

    w_flat = conv_w.reshape(-1).astype(jnp.float32)        # (98,)
    x2d = x.reshape(B, C, HW)                              # contiguous, free

    # ---- Stage 1: channel pooling, lane-dense, multi-channel blocks --------
    tcc = _pick_channel_tile(C, HW, itemsize, block_budget)
    ncb = pl.cdiv(C, tcc)
    pooled_max, pooled_mean = pl.pallas_call(
        _make_pool_kernel(C, tcc),
        out_shape=(jax.ShapeDtypeStruct((B, 1, HW), jnp.float32),
                   jax.ShapeDtypeStruct((B, 1, HW), jnp.float32)),
        grid=(B, ncb),
        in_specs=[pl.BlockSpec((1, tcc, HW), lambda b, cb: (b, cb, 0))],
        out_specs=(pl.BlockSpec((1, 1, HW), lambda b, cb: (b, 0, 0)),
                   pl.BlockSpec((1, 1, HW), lambda b, cb: (b, 0, 0))),
        compiler_params=pltpu.CompilerParams(
            dimension_semantics=("parallel", "arbitrary"),
            vmem_limit_bytes=vmem_limit),
    )(x2d)

    # ---- Stage 2: (B, H, W) suppression mask (tiny) -------------------------
    max_map = pooled_max.reshape(B, H, W)
    mean_map = pooled_mean.reshape(B, H, W)
    mask = pl.pallas_call(
        sa_mask_kernel,
        out_shape=jax.ShapeDtypeStruct((B, H, W), jnp.float32),
        in_specs=[
            pl.BlockSpec(memory_space=pltpu.MemorySpace.VMEM),
            pl.BlockSpec(memory_space=pltpu.MemorySpace.VMEM),
            pl.BlockSpec(memory_space=pltpu.MemorySpace.SMEM),
        ],
        out_specs=pl.BlockSpec(memory_space=pltpu.MemorySpace.VMEM),
        scratch_shapes=[
            pltpu.VMEM((B, H + 2 * PAD, W + 2 * PAD), jnp.float32),
            pltpu.VMEM((B, H + 2 * PAD, W + 2 * PAD), jnp.float32),
        ],
    )(max_map, mean_map, w_flat)

    # ---- Stage 3: x * mask, lane-dense, gridded & double-buffered -----------
    # (Note: for HW not a multiple of 128 — e.g. 14x14 maps — stores become
    #  masked; padding HW to the next 128 multiple would recover unmasked vst.)
    m2d = mask.reshape(B, 1, HW)
    tc = _pick_channel_tile(C, HW, itemsize, block_budget)
    # Keep >=2 parallel grid steps when possible (v7x has 2 TensorCores).
    if B * pl.cdiv(C, tc) < 2 and tc > 8:
        tc = max(8, (tc // 2 + 7) // 8 * 8)

    out2d = pl.pallas_call(
        sa_apply_kernel,
        out_shape=jax.ShapeDtypeStruct((B, C, HW), x.dtype),
        grid=(B, pl.cdiv(C, tc)),
        in_specs=[
            pl.BlockSpec((1, tc, HW), lambda b, cb: (b, cb, 0)),
            pl.BlockSpec((1, 1, HW), lambda b, cb: (b, 0, 0)),
        ],
        out_specs=pl.BlockSpec((1, tc, HW), lambda b, cb: (b, cb, 0)),
        compiler_params=pltpu.CompilerParams(
            dimension_semantics=("parallel", "parallel"),
            vmem_limit_bytes=vmem_limit),
    )(x2d, m2d)
    return out2d.reshape(B, C, H, W)


if __name__ == "__main__":
    key = jax.random.PRNGKey(0)
    kx_key, kw_key = jax.random.split(key)
    B, C, H, W = 2, 4, 16, 16
    x = jax.random.normal(kx_key, (B, C, H, W), jnp.float32)

    # Conv2d(2, 1, 7, bias=False) with kaiming_normal_(a=0, mode='fan_in'):
    # fan_in = 2 * 7 * 7, std = sqrt(2 / fan_in). BN affine init (w=1, b=0)
    # is folded into the kernel's BN formula.
    fan_in = 2 * K * K
    std = (2.0 / fan_in) ** 0.5
    conv_w = std * jax.random.normal(kw_key, (1, 2, K, K), jnp.float32)

    out = sa_forward(x, conv_w)
    jax.block_until_ready(out)
    print("KERNEL_OK")
</pallas_src>

<mosaic_0001>
module attributes {stable_mosaic.version = 11 : i64} {
  func.func @pool_kernel(%arg0: i32, %arg1: i32, %arg2: memref<1x4x256xf32, #tpu.memory_space<vmem>>, %arg3: memref<1x1x256xf32, #tpu.memory_space<vmem>>, %arg4: memref<1x1x256xf32, #tpu.memory_space<vmem>>) attributes {dimension_semantics = [#tpu.dimension_semantics<parallel>, #tpu.dimension_semantics<arbitrary>], iteration_bounds = array<i64: 2, 1>, scalar_prefetch = 0 : i64, scratch_operands = 0 : i64, tpu.core_type = #tpu.core_type<tc>, window_params = [{transform_indices = @transform_0, window_bounds = array<i64: 1, 4, 256>}, {transform_indices = @transform_1, window_bounds = array<i64: 1, 1, 256>}, {transform_indices = @transform_2, window_bounds = array<i64: 1, 1, 256>}]} {
    %c0 = arith.constant 0 : index
    %c0_0 = arith.constant 0 : index
    %c0_1 = arith.constant 0 : index
    %0 = vector.load %arg2[%c0, %c0_0, %c0_1] : memref<1x4x256xf32, #tpu.memory_space<vmem>>, vector<1x4x256xf32>
    %cst = arith.constant dense<0xFF800000> : vector<1x256xf32>
    %1 = vector.multi_reduction <maximumf>, %0, %cst [1] : vector<1x4x256xf32> to vector<1x256xf32>
    %2 = vector.shape_cast %1 : vector<1x256xf32> to vector<1x1x256xf32>
    %cst_2 = arith.constant dense<0.000000e+00> : vector<1x256xf32>
    %3 = vector.multi_reduction <add>, %0, %cst_2 [1] : vector<1x4x256xf32> to vector<1x256xf32>
    %4 = vector.shape_cast %3 : vector<1x256xf32> to vector<1x1x256xf32>
    %c0_i32 = arith.constant 0 : i32
    %5 = arith.cmpi eq, %arg1, %c0_i32 : i32
    %6 = arith.extui %5 : i1 to i32
    %c0_i32_3 = arith.constant 0 : i32
    %7 = arith.cmpi ne, %6, %c0_i32_3 : i32
    scf.if %7 {
      %c0_8 = arith.constant 0 : index
      %c0_9 = arith.constant 0 : index
      %c0_10 = arith.constant 0 : index
      %14 = vector.load %arg3[%c0_8, %c0_9, %c0_10] : memref<1x1x256xf32, #tpu.memory_space<vmem>>, vector<1x1x256xf32>
      tpu.vector_store %arg3[%c0_8, %c0_9, %c0_10], %2 {strides = array<i32>} : memref<1x1x256xf32, #tpu.memory_space<vmem>>, vector<1x1x256xf32>,
      %c0_11 = arith.constant 0 : index
      %c0_12 = arith.constant 0 : index
      %c0_13 = arith.constant 0 : index
      %15 = vector.load %arg4[%c0_11, %c0_12, %c0_13] : memref<1x1x256xf32, #tpu.memory_space<vmem>>, vector<1x1x256xf32>
      tpu.vector_store %arg4[%c0_11, %c0_12, %c0_13], %4 {strides = array<i32>} : memref<1x1x256xf32, #tpu.memory_space<vmem>>, vector<1x1x256xf32>,
    } else {
    }
    %c0_i32_4 = arith.constant 0 : i32
    %8 = arith.cmpi sgt, %arg1, %c0_i32_4 : i32
    %9 = arith.extui %8 : i1 to i32
    %c0_i32_5 = arith.constant 0 : i32
    %10 = arith.cmpi ne, %9, %c0_i32_5 : i32
    scf.if %10 {
      %c0_8 = arith.constant 0 : index
      %c0_9 = arith.constant 0 : index
      %c0_10 = arith.constant 0 : index
      %14 = vector.load %arg3[%c0_8, %c0_9, %c0_10] : memref<1x1x256xf32, #tpu.memory_space<vmem>>, vector<1x1x256xf32>
      %15 = arith.maximumf %14, %2 : vector<1x1x256xf32>
      %c0_11 = arith.constant 0 : index
      %c0_12 = arith.constant 0 : index
      %c0_13 = arith.constant 0 : index
      %16 = vector.load %arg3[%c0_11, %c0_12, %c0_13] : memref<1x1x256xf32, #tpu.memory_space<vmem>>, vector<1x1x256xf32>
      tpu.vector_store %arg3[%c0_11, %c0_12, %c0_13], %15 {strides = array<i32>} : memref<1x1x256xf32, #tpu.memory_space<vmem>>, vector<1x1x256xf32>,
      %c0_14 = arith.constant 0 : index
      %c0_15 = arith.constant 0 : index
      %c0_16 = arith.constant 0 : index
      %17 = vector.load %arg4[%c0_14, %c0_15, %c0_16] : memref<1x1x256xf32, #tpu.memory_space<vmem>>, vector<1x1x256xf32>
      %18 = arith.addf %17, %4 : vector<1x1x256xf32>
      %c0_17 = arith.constant 0 : index
      %c0_18 = arith.constant 0 : index
      %c0_19 = arith.constant 0 : index
      %19 = vector.load %arg4[%c0_17, %c0_18, %c0_19] : memref<1x1x256xf32, #tpu.memory_space<vmem>>, vector<1x1x256xf32>
      tpu.vector_store %arg4[%c0_17, %c0_18, %c0_19], %18 {strides = array<i32>} : memref<1x1x256xf32, #tpu.memory_space<vmem>>, vector<1x1x256xf32>,
    } else {
    }
    %c0_i32_6 = arith.constant 0 : i32
    %11 = arith.cmpi eq, %arg1, %c0_i32_6 : i32
    %12 = arith.extui %11 : i1 to i32
    %c0_i32_7 = arith.constant 0 : i32
    %13 = arith.cmpi ne, %12, %c0_i32_7 : i32
    scf.if %13 {
      %c0_8 = arith.constant 0 : index
      %c0_9 = arith.constant 0 : index
      %c0_10 = arith.constant 0 : index
      %14 = vector.load %arg4[%c0_8, %c0_9, %c0_10] : memref<1x1x256xf32, #tpu.memory_space<vmem>>, vector<1x1x256xf32>
      %cst_11 = arith.constant 2.500000e-01 : f32
      %15 = vector.broadcast %cst_11 : f32 to vector<1x1x256xf32>
      %16 = arith.mulf %14, %15 : vector<1x1x256xf32>
      %c0_12 = arith.constant 0 : index
      %c0_13 = arith.constant 0 : index
      %c0_14 = arith.constant 0 : index
      %17 = vector.load %arg4[%c0_12, %c0_13, %c0_14] : memref<1x1x256xf32, #tpu.memory_space<vmem>>, vector<1x1x256xf32>
      tpu.vector_store %arg4[%c0_12, %c0_13, %c0_14], %16 {strides = array<i32>} : memref<1x1x256xf32, #tpu.memory_space<vmem>>, vector<1x1x256xf32>,
    } else {
    }
    return
  }
  func.func @transform_0(%arg0: i32, %arg1: i32) -> (i32, i32, i32) {
    %c0_i32 = arith.constant 0 : i32
    %c0_i32_0 = arith.constant 0 : i32
    return %arg0, %arg1, %c0_i32 : i32, i32, i32
  }
  func.func @transform_1(%arg0: i32, %arg1: i32) -> (i32, i32, i32) {
    %c0_i32 = arith.constant 0 : i32
    %c0_i32_0 = arith.constant 0 : i32
    %c0_i32_1 = arith.constant 0 : i32
    return %arg0, %c0_i32, %c0_i32_0 : i32, i32, i32
  }
  func.func @transform_2(%arg0: i32, %arg1: i32) -> (i32, i32, i32) {
    %c0_i32 = arith.constant 0 : i32
    %c0_i32_0 = arith.constant 0 : i32
    %c0_i32_1 = arith.constant 0 : i32
    return %arg0, %c0_i32, %c0_i32_0 : i32, i32, i32
  }
}

</mosaic_0001>

<llo_original>
// kernel: tpu_custom_call.1
$region0: #{tpu_custom_call.1}
  #allocation0 [shape = 'u32[]', space=smem, size = 0x4, offset = 0x4, fixed_abs, tag = 'smem constant byte address 0x4 - core index']
  #allocation1 [shape = 'u32[144,128]{1,0:T(1,128)}', space=vmem, size = 0x12000, scoped, tag = 'internal scratch']
  %s0 = inlined_call_operand.hbm [shape: f32[2,4,256], index: 0, kind: input, shape index: {}]
  %s1 = inlined_call_operand.hbm [shape: f32[2,1,256], index: 1, kind: output, shape index: {0}]
  %s2 = inlined_call_operand.hbm [shape: f32[2,1,256], index: 2, kind: output, shape index: {1}]
  %3 = xla_tuple %s1, %s2
  %s4 = sld [smem:[#allocation0]]
  $region61: #{tpu_custom_call.1} parent=0
    _
  %s6 = ssub.s32 1, %s4
  %s7 = scalar_select 0, %s6, %s4
  $region1: #{tpu_custom_call.1} parent=0
    #allocation2 [shape = 'u8[8192]{0}', space=vmem, size = 0x2000, scoped, tag = 'input window, operand 0']
    #allocation3 [shape = 's32[2]{0}', space=sflag, size = 0x8, scoped, tag = 'scoped memory for tpu_custom_call.1']
    #allocation4 [shape = 's32[2]{0}', space=sflag, size = 0x8, scoped, tag = 'scoped memory for tpu_custom_call.1']
    #allocation5 [shape = 'u8[2048]{0}', space=vmem, size = 0x800, scoped, tag = 'output window, operand 0']
    #allocation6 [shape = 'u8[2048]{0}', space=vmem, size = 0x800, scoped, tag = 'output window, operand 1']
    #allocation7 [shape = 's32[2]{0}', space=sflag, size = 0x8, scoped, tag = 'scoped memory for tpu_custom_call.1']
    %8 = vsyncpa [#allocation3], 0
    %s9 = scalar_lea.sflag [#allocation3], 1
    %10 = vsyncpa %s9, 0
    %11 = vsyncpa [#allocation4], 0
    %s12 = scalar_lea.sflag [#allocation4], 1
    %13 = vsyncpa %s12, 0
    %14 = vsyncpa [#allocation7], 0
    %s15 = scalar_lea.sflag [#allocation7], 1
    %16 = vsyncpa %s15, 0
    loop: start=0, step=1, limit=4
    $region2: #{tpu_custom_call.1} parent=1 // loop_pre_header
      _
    $region3: #{tpu_custom_call.1} parent=1 // loop_header
      %s18 = sphi 0, %s22
      %p19 = scmp.ge.s32.totalorder %s18, 4
      %s25 = sphi 0, %s37
      %s26 = sphi 0, %s33
      %s27 = sphi 0, %s25
      %s28 = sphi 0, %s26
      %s29 = sphi 0, %s27
      %s30 = sphi 0, %s28
      %s42 = sphi 0, %s44
      %s45 = sphi 0, %s42
      %s46 = sphi 0, %s45
      %s62 = sphi 0, %s46
      %s68 = sphi 0, %s70
      %s71 = sphi 0, %s68
      %s72 = sphi 0, %s71
      %s88 = sphi 0, %s72
      %s94 = sphi 0, %s96
      %s97 = sphi 0, %s94
      %s98 = sphi 0, %s97
      %s114 = sphi 0, %s98
    $region4: #{tpu_custom_call.1} parent=1 // loop_header_branch
      %21 = sbr.rel (%p19) target = $region8
    $region5: #{tpu_custom_call.1} parent=1 // loop_body
      %s23 = ssub.s32 %s18, 1
      %s24 = ssub.s32 %s18, 2
      %s31 = sadd.s32 1, %s26
      %p32 = scmp.ge.s32.totalorder %s31, 1
      %s33 = scalar_select %p32, 0, %s31
      %s34 = sadd.s32 1, %s25
      %s35 = scalar_select %p32, %s34, %s25
      %p36 = scmp.ge.s32.totalorder %s35, 2
      %s37 = scalar_select %p36, 0, %s35
      %s38 = ssub.s32 %s25, %s37
      %s39 = ssub.s32 %s26, %s33
      %s40 = sor.u32 %s38, %s39
      %p41 = scmp.eq.s32.totalorder %s40, 0
      %s43 = sadd.s32 %s42, 1
      %s44 = scalar_select %p41, %s42, %s43
      %p47 = pneg %p41
      %p48 = scmp.eq.s32.totalorder %s18, 1
      %p49 = por %p47, %p48
      %p50 = scmp.ne.s32.totalorder %s42, %s45
      %p51 = scmp.eq.s32.totalorder %s18, 0
      %p52 = por %p50, %p51
      %p53 = scmp.ne.s32.totalorder %s42, %s45
      %p54 = scmp.eq.s32.totalorder %s23, 1
      %p55 = por %p53, %p54
      %p56 = scmp.ne.s32.totalorder %s45, %s46
      %p57 = scmp.eq.s32.totalorder %s23, 0
      %p58 = por %p56, %p57
      %p59 = scmp.ne.s32.totalorder %s45, %s46
      %p60 = scmp.eq.s32.totalorder %s24, 1
      %p61 = por %p59, %p60
      %p63 = scmp.ne.s32.totalorder %s46, %s62
      %p64 = scmp.eq.s32.totalorder %s24, 0
      %p65 = por %p63, %p64
      %s66 = ssub.s32 %s25, %s37
      %p67 = scmp.eq.s32.totalorder %s66, 0
      %s69 = sadd.s32 %s68, 1
      %s70 = scalar_select %p67, %s68, %s69
      %p73 = pneg %p67
      %p74 = scmp.eq.s32.totalorder %s18, 1
      %p75 = por %p73, %p74
      %p76 = scmp.ne.s32.totalorder %s68, %s71
      %p77 = scmp.eq.s32.totalorder %s18, 0
      %p78 = por %p76, %p77
      %p79 = scmp.ne.s32.totalorder %s68, %s71
      %p80 = scmp.eq.s32.totalorder %s23, 1
      %p81 = por %p79, %p80
      %p82 = scmp.ne.s32.totalorder %s71, %s72
      %p83 = scmp.eq.s32.totalorder %s23, 0
      %p84 = por %p82, %p83
      %p85 = scmp.ne.s32.totalorder %s71, %s72
      %p86 = scmp.eq.s32.totalorder %s24, 1
      %p87 = por %p85, %p86
      %p89 = scmp.ne.s32.totalorder %s72, %s88
      %p90 = scmp.eq.s32.totalorder %s24, 0
      %p91 = por %p89, %p90
      %s92 = ssub.s32 %s25, %s37
      %p93 = scmp.eq.s32.totalorder %s92, 0
      %s95 = sadd.s32 %s94, 1
      %s96 = scalar_select %p93, %s94, %s95
      %p99 = pneg %p93
      %p100 = scmp.eq.s32.totalorder %s18, 1
      %p101 = por %p99, %p100
      %p102 = scmp.ne.s32.totalorder %s94, %s97
      %p103 = scmp.eq.s32.totalorder %s18, 0
      %p104 = por %p102, %p103
      %p105 = scmp.ne.s32.totalorder %s94, %s97
      %p106 = scmp.eq.s32.totalorder %s23, 1
      %p107 = por %p105, %p106
      %p108 = scmp.ne.s32.totalorder %s97, %s98
      %p109 = scmp.eq.s32.totalorder %s23, 0
      %p110 = por %p108, %p109
      %p111 = scmp.ne.s32.totalorder %s97, %s98
      %p112 = scmp.eq.s32.totalorder %s24, 1
      %p113 = por %p111, %p112
      %p115 = scmp.ne.s32.totalorder %s98, %s114
      %p116 = scmp.eq.s32.totalorder %s24, 0
      %p117 = por %p115, %p116
      %p118 = scmp.le.s32.totalorder 1, %s18
      %p119 = scmp.lt.s32.totalorder %s18, 3
      %p120 = pnand %p118, %p119
      %p121 = pneg %p120
      // Predicated region
      $region9: #{tpu_custom_call.1} parent=5 // pred_check
        _
      $region10: #{tpu_custom_call.1} parent=5 // pred_check_branch
        %123 = sbr.rel (%p120) target = $region12
      $region11: #{tpu_custom_call.1} parent=5 // pred_region
        %s124 = ssub.s32 %s18, 1
      $region12: #{tpu_custom_call.1} parent=5 // pred_fallthru
        _
      %p125 = scmp.lt.s32.totalorder %s18, 2
      // Predicated region
      $region13: #{tpu_custom_call.1} parent=5 // pred_check
        %p126 = pneg %p125
      $region14: #{tpu_custom_call.1} parent=5 // pred_check_branch
        %128 = sbr.rel (%p126) target = $region16
      $region15: #{tpu_custom_call.1} parent=5 // pred_region
        // Predicated region
        $region17: #{tpu_custom_call.1} parent=15 // pred_check
          %p129 = pneg %p52
        $region18: #{tpu_custom_call.1} parent=15 // pred_check_branch
          %131 = sbr.rel (%p129) target = $region20
        $region19: #{tpu_custom_call.1} parent=15 // pred_region
          %s132 = sand.u32 %s42, 1
          %s133 = scalar_lea.sflag [#allocation3], %s132
          %s134 = sand.u32 %s42, 1
          %s135 = smul.addr %s134, 8
          %s136 = scalar_lea.vmem [#allocation2], %s135
          %s138 = ssub.s32 128, 128
          %139 = vsyncadd %s133, %s138
          %s140 = smul.addr %s26, 2
          %s141 = smul.addr %s25, 2
          %s142 = sadd.s32 %s140, %s141
          %s143 = smul.addr %s142, 64
          %s144 = scalar_lea.hbm %s0, %s143
          %s146 = sshll.u32 %s136, 4
          %s147 = int_to_ptr.vmem [resolvable:$true] %s146
          %149 = dma.hbm_to_vmem [thread:$0]  %s144, 128, %s147, %s133
        $region20: #{tpu_custom_call.1} parent=15 // pred_fallthru
          _
      $region16: #{tpu_custom_call.1} parent=5 // pred_fallthru
        _
      %p150 = scmp.le.s32.totalorder 1, %s18
      %p151 = scmp.lt.s32.totalorder %s18, 3
      %p152 = pnand %p150, %p151
      %p153 = pneg %p152
      // Predicated region
      $region21: #{tpu_custom_call.1} parent=5 // pred_check
        _
      $region22: #{tpu_custom_call.1} parent=5 // pred_check_branch
        %155 = sbr.rel (%p152) target = $region24
      $region23: #{tpu_custom_call.1} parent=5 // pred_region
        %s156 = ssub.s32 %s18, 1
        %s157 = sand.u32 %s45, 1
        %s158 = scalar_lea.sflag [#allocation3], %s157
        %s159 = sand.u32 %s45, 1
        %s160 = smul.addr %s159, 8
        %s161 = scalar_lea.vmem [#allocation2], %s160
        // Predicated region
        $region25: #{tpu_custom_call.1} parent=23 // pred_check
          %p162 = pneg %p58
        $region26: #{tpu_custom_call.1} parent=23 // pred_check_branch
          %164 = sbr.rel (%p162) target = $region28
        $region27: #{tpu_custom_call.1} parent=23 // pred_region
          %165 = dma.done %s158, 128
        $region28: #{tpu_custom_call.1} parent=23 // pred_fallthru
          _
        %s166 = sand.u32 %s45, 1
        %s167 = scalar_lea.sflag [#allocation3], %s166
        %s168 = sand.u32 %s45, 1
        %s169 = smul.addr %s168, 8
        %s170 = scalar_lea.vmem [#allocation2], %s169
        %p171 = pneg %p58
        %p172 = pneg %p55
        %p173 = pneg %p84
        %p174 = pneg %p81
        %s175 = sand.u32 %s71, 1
        %s176 = scalar_lea.sflag [#allocation4], %s175
        %s177 = sand.u32 %s71, 1
        %s178 = smul.addr %s177, 2
        %s179 = scalar_lea.vmem [#allocation5], %s178
        %p180 = pneg %p110
        %p181 = pneg %p107
        %s182 = sand.u32 %s97, 1
        %s183 = scalar_lea.sflag [#allocation7], %s182
        %s184 = sand.u32 %s97, 1
        %s185 = smul.addr %s184, 2
        %s186 = scalar_lea.vmem [#allocation6], %s185
        %v187 = vld [vmem:[%s161] sm:$0xff]
        %v189 = vcombine.high %v187, %v187
        %vm191 = vcmask 1043456
        %v192 = vsel %vm191, %v187, -inf
        %v193 = vrot.slane %v192, 4
        %v194 = vmax.f32 %v192, %v193
        %v195 = vrot.slane %v194, 2
        %v196 = vmax.f32 %v194, %v195
        %v197 = vrot.slane %v196, 1
        %v198 = vmax.f32 %v196, %v197
        %v199 = vsel %vm191, %v189, -inf
        %v200 = vrot.slane %v199, 4
        %v201 = vmax.f32 %v199, %v200
        %v202 = vrot.slane %v201, 2
        %v203 = vmax.f32 %v201, %v202
        %v204 = vrot.slane %v203, 1
        %v205 = vmax.f32 %v203, %v204
        %v206 = vsel %vm191, %v187, 0.0
        %v207 = vrot.slane %v206, 4
        %v208 = vadd.f32 %v206, %v207
        %v209 = vrot.slane %v208, 2
        %v210 = vadd.f32 %v208, %v209
        %v211 = vrot.slane %v210, 1
        %v212 = vadd.f32 %v210, %v211
        %v213 = vsel %vm191, %v189, 0.0
        %v214 = vrot.slane %v213, 4
        %v215 = vadd.f32 %v213, %v214
        %v216 = vrot.slane %v215, 2
        %v217 = vadd.f32 %v215, %v216
        %v218 = vrot.slane %v217, 1
        %v219 = vadd.f32 %v217, %v218
        %p220 = scmp.eq.s32.totalorder %s28, 0
        // Predicated region
        $region29: #{tpu_custom_call.1} parent=23 // pred_check
          %p221 = pneg %p220
        $region30: #{tpu_custom_call.1} parent=23 // pred_check_branch
          %223 = sbr.rel (%p221) target = $region32
        $region31: #{tpu_custom_call.1} parent=23 // pred_region
          %v226 = vcombine.low %v198, %v205
          %v228 = vunpack.c.l.s4 1966171168
          %v229 = vunpack.c.0.s8 %v228
          %v230 = vlaneseq
          %v231 = vshrl.u32 %v230, 7
          %v232 = vsub.s32 %v229, %v231
          %v233 = vrot.slane %v226, %v232
          %v235 = vunpack.c.l.s4 1966171168
          %v236 = vunpack.c.0.s8 %v235
          %v237 = vlaneseq
          %v238 = vshrl.u32 %v237, 7
          %v239 = vsub.s32 %v236, %v238
          %v240 = vrot.slane %v233, %v239
          %v242 = vlaneseq
          %vm243 = vcmp.ge.s32.totalorder %v242, 0
          %vm244 = vcmp.lt.s32.totalorder %v242, 256
          %vm245 = vmand %vm243, %vm244
          %246 = vst.msk [vmem:[%s179] sm:$0x3] %vm245, %v240
          %v249 = vcombine.low %v212, %v219
          %v251 = vunpack.c.l.s4 1966171168
          %v252 = vunpack.c.0.s8 %v251
          %v253 = vlaneseq
          %v254 = vshrl.u32 %v253, 7
          %v255 = vsub.s32 %v252, %v254
          %v256 = vrot.slane %v249, %v255
          %v258 = vunpack.c.l.s4 1966171168
          %v259 = vunpack.c.0.s8 %v258
          %v260 = vlaneseq
          %v261 = vshrl.u32 %v260, 7
          %v262 = vsub.s32 %v259, %v261
          %v263 = vrot.slane %v256, %v262
          %265 = vst.msk [vmem:[%s186] sm:$0x3] %vm245, %v263
        $region32: #{tpu_custom_call.1} parent=23 // pred_fallthru
          _
        %p266 = scmp.gt.s32.totalorder %s28, 0
        // Predicated region
        $region33: #{tpu_custom_call.1} parent=23 // pred_check
          %p267 = pneg %p266
        $region34: #{tpu_custom_call.1} parent=23 // pred_check_branch
          %269 = sbr.rel (%p267) target = $region36
        $region35: #{tpu_custom_call.1} parent=23 // pred_region
          %v270 = vld [vmem:[%s179] sm:$0x3]
          %v273 = vcombine.low %v198, %v205
          %v275 = vunpack.c.l.s4 1966171168
          %v276 = vunpack.c.0.s8 %v275
          %v277 = vlaneseq
          %v278 = vshrl.u32 %v277, 7
          %v279 = vsub.s32 %v276, %v278
          %v280 = vrot.slane %v273, %v279
          %v282 = vunpack.c.l.s4 1966171168
          %v283 = vunpack.c.0.s8 %v282
          %v284 = vlaneseq
          %v285 = vshrl.u32 %v284, 7
          %v286 = vsub.s32 %v283, %v285
          %v287 = vrot.slane %v280, %v286
          %v289 = vmax.f32 %v270, %v287
          %v290 = vlaneseq
          %vm291 = vcmp.ge.s32.totalorder %v290, 0
          %vm292 = vcmp.lt.s32.totalorder %v290, 256
          %vm293 = vmand %vm291, %vm292
          %294 = vst.msk [vmem:[%s179] sm:$0x3] %vm293, %v289
          %v295 = vld [vmem:[%s186] sm:$0x3]
          %v298 = vcombine.low %v212, %v219
          %v300 = vunpack.c.l.s4 1966171168
          %v301 = vunpack.c.0.s8 %v300
          %v302 = vlaneseq
          %v303 = vshrl.u32 %v302, 7
          %v304 = vsub.s32 %v301, %v303
          %v305 = vrot.slane %v298, %v304
          %v307 = vunpack.c.l.s4 1966171168
          %v308 = vunpack.c.0.s8 %v307
          %v309 = vlaneseq
          %v310 = vshrl.u32 %v309, 7
          %v311 = vsub.s32 %v308, %v310
          %v312 = vrot.slane %v305, %v311
          %v314 = vadd.f32 %v295, %v312
          %315 = vst.msk [vmem:[%s186] sm:$0x3] %vm293, %v314
        $region36: #{tpu_custom_call.1} parent=23 // pred_fallthru
          _
        // Predicated region
        $region37: #{tpu_custom_call.1} parent=23 // pred_check
          %p316 = pneg %p220
        $region38: #{tpu_custom_call.1} parent=23 // pred_check_branch
          %318 = sbr.rel (%p316) target = $region40
        $region39: #{tpu_custom_call.1} parent=23 // pred_region
          %v319 = vld [vmem:[%s186] sm:$0x3]
          %v320 = vmul.f32 %v319, 0.25
          %v321 = vlaneseq
          %vm322 = vcmp.ge.s32.totalorder %v321, 0
          %vm323 = vcmp.lt.s32.totalorder %v321, 256
          %vm324 = vmand %vm322, %vm323
          %325 = vst.msk [vmem:[%s186] sm:$0x3] %vm324, %v320
        $region40: #{tpu_custom_call.1} parent=23 // pred_fallthru
          _
        %s326 = sand.u32 %s71, 1
        %s327 = scalar_lea.sflag [#allocation4], %s326
        %s328 = sand.u32 %s71, 1
        %s329 = smul.addr %s328, 2
        %s330 = scalar_lea.vmem [#allocation5], %s329
        %s331 = sand.u32 %s97, 1
        %s332 = scalar_lea.sflag [#allocation7], %s331
        %s333 = sand.u32 %s97, 1
        %s334 = smul.addr %s333, 2
        %s335 = scalar_lea.vmem [#allocation6], %s334
        // Predicated region
        $region41: #{tpu_custom_call.1} parent=23 // pred_check
          %p336 = pneg %p81
        $region42: #{tpu_custom_call.1} parent=23 // pred_check_branch
          %338 = sbr.rel (%p336) target = $region44
        $region43: #{tpu_custom_call.1} parent=23 // pred_region
          %s340 = ssub.s32 32, 32
          %341 = vsyncadd %s327, %s340
          %s342 = smul.addr %s27, 2
          %s343 = smul.addr %s342, 16
          %s344 = scalar_lea.hbm %s1, %s343
          %s346 = sshll.u32 %s330, 4
          %s347 = int_to_ptr.vmem [resolvable:$true] %s346
          %349 = dma.vmem_to_hbm [thread:$0]  %s347, 32, %s344, %s327
        $region44: #{tpu_custom_call.1} parent=23 // pred_fallthru
          _
        // Predicated region
        $region45: #{tpu_custom_call.1} parent=23 // pred_check
          %p350 = pneg %p107
        $region46: #{tpu_custom_call.1} parent=23 // pred_check_branch
          %352 = sbr.rel (%p350) target = $region48
        $region47: #{tpu_custom_call.1} parent=23 // pred_region
          %s354 = ssub.s32 32, 32
          %355 = vsyncadd %s332, %s354
          %s356 = smul.addr %s27, 2
          %s357 = smul.addr %s356, 16
          %s358 = scalar_lea.hbm %s2, %s357
          %s360 = sshll.u32 %s335, 4
          %s361 = int_to_ptr.vmem [resolvable:$true] %s360
          %363 = dma.vmem_to_hbm [thread:$0]  %s361, 32, %s358, %s332
        $region48: #{tpu_custom_call.1} parent=23 // pred_fallthru
          _
      $region24: #{tpu_custom_call.1} parent=5 // pred_fallthru
        _
      %p364 = scmp.le.s32.totalorder 2, %s18
      // Predicated region
      $region49: #{tpu_custom_call.1} parent=5 // pred_check
        %p365 = pneg %p364
      $region50: #{tpu_custom_call.1} parent=5 // pred_check_branch
        %367 = sbr.rel (%p365) target = $region52
      $region51: #{tpu_custom_call.1} parent=5 // pred_region
        %s368 = ssub.s32 %s18, 2
        // Predicated region
        $region53: #{tpu_custom_call.1} parent=51 // pred_check
          %p369 = pneg %p87
        $region54: #{tpu_custom_call.1} parent=51 // pred_check_branch
          %371 = sbr.rel (%p369) target = $region56
        $region55: #{tpu_custom_call.1} parent=51 // pred_region
          %s372 = sand.u32 %s72, 1
          %s373 = scalar_lea.sflag [#allocation4], %s372
          %s374 = sand.u32 %s72, 1
          %s375 = smul.addr %s374, 2
          %s376 = scalar_lea.vmem [#allocation5], %s375
          %377 = dma.done %s373, 32
        $region56: #{tpu_custom_call.1} parent=51 // pred_fallthru
          _
        // Predicated region
        $region57: #{tpu_custom_call.1} parent=51 // pred_check
          %p378 = pneg %p113
        $region58: #{tpu_custom_call.1} parent=51 // pred_check_branch
          %380 = sbr.rel (%p378) target = $region60
        $region59: #{tpu_custom_call.1} parent=51 // pred_region
          %s381 = sand.u32 %s98, 1
          %s382 = scalar_lea.sflag [#allocation7], %s381
          %s383 = sand.u32 %s98, 1
          %s384 = smul.addr %s383, 2
          %s385 = scalar_lea.vmem [#allocation6], %s384
          %386 = dma.done %s382, 32
        $region60: #{tpu_custom_call.1} parent=51 // pred_fallthru
          _
      $region52: #{tpu_custom_call.1} parent=5 // pred_fallthru
        _
    $region6: #{tpu_custom_call.1} parent=1 // loop_footer
      %s22 = sadd.s32 1, %s18
    $region7: #{tpu_custom_call.1} parent=1 // loop_footer_branch
      %17 = sbr.rel target = $region3
    $region8: #{tpu_custom_call.1} parent=1 // loop_exit
      _
    %387 = vsyncpa [#allocation3], 1
    %s388 = scalar_lea.sflag [#allocation3], 1
    %389 = vsyncpa %s388, 1
    %390 = vsyncpa [#allocation4], 1
    %s391 = scalar_lea.sflag [#allocation4], 1
    %392 = vsyncpa %s391, 1
    %393 = vsyncpa [#allocation7], 1
    %s394 = scalar_lea.sflag [#allocation7], 1
    %395 = vsyncpa %s394, 1

</llo_original>
